<compile_context>
chip_gen: v7x
topology: tpu7x:2x2x1
jax: 0.10.0
libtpu: 0.0.40
codegen_flags: <defaults>
</compile_context>

<pallas_src>
import jax
import jax.numpy as jnp
from jax.experimental import pallas as pl
from jax.experimental.pallas import tpu as pltpu


_LANES = 128          # lane width: padded output width of every fused layer
_HEAD_HIDDEN = 32     # hard-coded in the PyTorch module (fc_adv1 / fc_val1)


def _round_up(x, m):
    return ((x + m - 1) // m) * m


# ---------------------------------------------------------------------------
# Kernel: whole forward for one batch tile — 4 MXU matmuls, bias adds on VPU
# ---------------------------------------------------------------------------
def duel_q_kernel(x_ref, w1_ref, wblob_ref, bias_ref, out_ref):
    """x_ref:     [bt, S]          bf16 state tile
       w1_ref:    [S, 128]         bf16 fc1 weight (padded to 128 lanes)
       wblob_ref: [3*128, 128]     bf16 fused (w2 | adv1+val1 | folded head) blob
       bias_ref:  [8, 128]         f32 bias rows (b1, b2, bh1, folded bh2)
       out_ref:   [bt, 128]        f32 lane-dense Q output (cols >= A are zero)."""
    x = x_ref[...]
    w1 = w1_ref[...]
    w2 = wblob_ref[pl.ds(0, _LANES), :]                 # fc2
    wh1 = wblob_ref[pl.ds(_LANES, _LANES), :]           # fc_adv1 | fc_val1
    wh2 = wblob_ref[pl.ds(2 * _LANES, _LANES), :]       # folded dueling head

    b1 = bias_ref[pl.ds(0, 1), :]
    b2 = bias_ref[pl.ds(1, 1), :]
    bh1 = bias_ref[pl.ds(2, 1), :]
    bh2 = bias_ref[pl.ds(3, 1), :]

    h = jnp.maximum(
        jnp.dot(x, w1, preferred_element_type=jnp.float32) + b1, 0.0)
    h = jnp.maximum(
        jnp.dot(h.astype(jnp.bfloat16), w2,
                preferred_element_type=jnp.float32) + b2, 0.0)
    h = jnp.maximum(
        jnp.dot(h.astype(jnp.bfloat16), wh1,
                preferred_element_type=jnp.float32) + bh1, 0.0)
    # Final matmul already yields Q directly (dueling combine folded into wh2).
    q = jnp.dot(h.astype(jnp.bfloat16), wh2,
                preferred_element_type=jnp.float32) + bh2
    out_ref[...] = q.astype(out_ref.dtype)


# ---------------------------------------------------------------------------
# Parameter fusion (done once, outside the kernel)
# ---------------------------------------------------------------------------
def fuse_params(params, state_size, action_size, fc1_units=64, fc2_units=64):
    """Pack weights into (S,128) bf16 + (384,128) bf16 blob + (8,128) f32 biases.

    The dueling combine  q = val - (adv - mean(adv))  is folded into the last
    layer:  wh2[:, j] carries  (mean_k Wa2[:,k] - Wa2[:,j])  on the adv-hidden
    rows and Wv2 on the val-hidden rows; the folded bias is
    bv2 - ba2_j + mean(ba2)."""
    C, S, A, HH = _LANES, state_size, action_size, _HEAD_HIDDEN
    # TODO(synk): layers wider than 128 lanes would need column tiling.
    assert fc1_units <= C and fc2_units <= C and 2 * HH <= C and A <= C

    def b(name):
        return params[name].reshape(-1)

    # Layer 1 (kept separate: its K dim = state_size is tiny / arbitrary).
    w1 = jnp.zeros((S, C), jnp.float32).at[:, :fc1_units].set(params["w1"])

    # Layer 2.
    w2 = jnp.zeros((C, C), jnp.float32).at[:fc1_units, :fc2_units].set(params["w2"])

    # Fused head hidden: adv1 | val1.
    wh1 = jnp.zeros((C, C), jnp.float32)
    wh1 = wh1.at[:fc2_units, :HH].set(params["wa1"])
    wh1 = wh1.at[:fc2_units, HH:2 * HH].set(params["wv1"])

    # Final layer with the dueling combine folded in.
    wa2 = params["wa2"]                                   # (HH, A)
    wv2 = params["wv2"]                                   # (HH, 1)
    wa2_mean = jnp.mean(wa2, axis=1, keepdims=True)       # (HH, 1)
    wh2 = jnp.zeros((C, C), jnp.float32)
    wh2 = wh2.at[:HH, :A].set(wa2_mean - wa2)
    wh2 = wh2.at[HH:2 * HH, :A].set(jnp.broadcast_to(wv2, (HH, A)))

    # Biases (kept f32; added on the VPU after f32 accumulation).
    biases = jnp.zeros((8, C), jnp.float32)
    biases = biases.at[0, :fc1_units].set(b("b1"))
    biases = biases.at[1, :fc2_units].set(b("b2"))
    biases = biases.at[2, :HH].set(b("ba1"))
    biases = biases.at[2, HH:2 * HH].set(b("bv1"))
    bh2 = b("bv2")[0] - b("ba2") + jnp.mean(b("ba2"))
    biases = biases.at[3, :A].set(bh2)

    wblob = jnp.concatenate([w2, wh1, wh2], axis=0)        # (384, 128)
    return w1.astype(jnp.bfloat16), wblob.astype(jnp.bfloat16), biases


# ---------------------------------------------------------------------------
# Wrapper
# ---------------------------------------------------------------------------
def _choose_batch_tile(batch):
    """Returns (batch_tile, padded_batch).

    Single grid step up to 1024 rows: v5e/v6e have one TensorCore (extra grid
    steps are a pure serial loop) and on v7x splitting would duplicate the
    resident weight-blob fetch per core for microseconds of compute.  Large
    batches use 1024-row tiles (multiple of 256 → fills v6e/v7x MXU rows) on a
    'parallel' axis so v7x can shard them across its two TensorCores."""
    padded = _round_up(max(batch, 16), 16)   # 16: bf16 sublane packing
    if padded <= 1024:
        return padded, padded
    tile = 1024
    return tile, _round_up(padded, tile)


def duel_qnetwork_forward(state, w1, wblob, biases, *, action_size,
                          batch_tile=None):
    B, S = state.shape
    assert w1.shape == (S, _LANES)
    assert wblob.shape == (3 * _LANES, _LANES)
    assert biases.shape == (8, _LANES)

    if batch_tile is None:
        batch_tile, padded_b = _choose_batch_tile(B)
    else:
        padded_b = _round_up(B, batch_tile)

    x = state.astype(jnp.bfloat16)
    if padded_b != B:
        x = jnp.pad(x, ((0, padded_b - B), (0, 0)))   # ragged batch edge only

    grid = (padded_b // batch_tile,)
    q = pl.pallas_call(
        duel_q_kernel,
        out_shape=jax.ShapeDtypeStruct((padded_b, _LANES), jnp.float32),
        grid_spec=pltpu.PrefetchScalarGridSpec(
            num_scalar_prefetch=0,
            grid=grid,
            in_specs=[
                pl.BlockSpec((batch_tile, S), lambda i: (i, 0)),
                pl.BlockSpec((S, _LANES), lambda i: (0, 0)),           # resident
                pl.BlockSpec((3 * _LANES, _LANES), lambda i: (0, 0)),  # resident
                pl.BlockSpec((8, _LANES), lambda i: (0, 0)),           # resident
            ],
            out_specs=pl.BlockSpec((batch_tile, _LANES), lambda i: (i, 0)),
        ),
        compiler_params=pltpu.CompilerParams(
            dimension_semantics=("parallel",)),
    )(x, w1, wblob, biases)
    # Lane-dense kernel output; valid Q-values live in the first `action_size` lanes.
    return q[:B, :action_size]


# ---------------------------------------------------------------------------
# Init + pure-JAX reference
# ---------------------------------------------------------------------------
def init_params(key, state_size, action_size, fc1_units=64, fc2_units=64):
    """Deterministic init mimicking nn.Linear's uniform(-1/sqrt(fan_in), +)."""
    dims = [
        ("w1", "b1", state_size, fc1_units),
        ("w2", "b2", fc1_units, fc2_units),
        ("wa1", "ba1", fc2_units, _HEAD_HIDDEN),
        ("wa2", "ba2", _HEAD_HIDDEN, action_size),
        ("wv1", "bv1", fc2_units, _HEAD_HIDDEN),
        ("wv2", "bv2", _HEAD_HIDDEN, 1),
    ]
    params = {}
    for wname, bname, fan_in, fan_out in dims:
        key, kw, kb = jax.random.split(key, 3)
        bound = 1.0 / jnp.sqrt(jnp.float32(fan_in))
        params[wname] = jax.random.uniform(
            kw, (fan_in, fan_out), jnp.float32, -bound, bound)
        params[bname] = jax.random.uniform(
            kb, (1, fan_out), jnp.float32, -bound, bound)
    return params


def reference_forward(state, params):
    """Matches PyTorch Duel_Qnetwork.forward exactly: q = val - (adv - mean(adv))."""
    relu = lambda t: jnp.maximum(t, 0.0)
    h = relu(state @ params["w1"] + params["b1"])
    h = relu(h @ params["w2"] + params["b2"])
    adv = relu(h @ params["wa1"] + params["ba1"]) @ params["wa2"] + params["ba2"]
    adv = adv - jnp.mean(adv, axis=-1, keepdims=True)
    val = relu(h @ params["wv1"] + params["bv1"]) @ params["wv2"] + params["bv2"]
    return val - adv


if __name__ == "__main__":
    state_size, action_size = 8, 4
    batch = 16

    key = jax.random.PRNGKey(0)
    key, kp, kx = jax.random.split(key, 3)
    params = init_params(kp, state_size, action_size)
    state = jax.random.normal(kx, (batch, state_size), jnp.float32)

    w1, wblob, biases = fuse_params(params, state_size, action_size)

    q = duel_qnetwork_forward(state, w1, wblob, biases, action_size=action_size)
    q = jax.block_until_ready(q)

    q_ref = reference_forward(state, params)
    assert q.shape == (batch, action_size)
    # bf16 weights/activations (f32 accumulation) → relax tolerance vs f32 reference.
    assert jnp.allclose(q, q_ref, atol=5e-2, rtol=5e-2), "mismatch vs reference"
    print("KERNEL_OK")
</pallas_src>

<mosaic_0001>
module attributes {stable_mosaic.version = 11 : i64} {
  func.func @duel_q_kernel(%arg0: i32, %arg1: memref<16x8xbf16, #tpu.memory_space<vmem>>, %arg2: memref<8x128xbf16, #tpu.memory_space<vmem>>, %arg3: memref<384x128xbf16, #tpu.memory_space<vmem>>, %arg4: memref<8x128xf32, #tpu.memory_space<vmem>>, %arg5: memref<16x128xf32, #tpu.memory_space<vmem>>) attributes {dimension_semantics = [#tpu.dimension_semantics<parallel>], iteration_bounds = array<i64: 1>, scalar_prefetch = 0 : i64, scratch_operands = 0 : i64, tpu.core_type = #tpu.core_type<tc>, window_params = [{transform_indices = @transform_0, window_bounds = array<i64: 16, 8>}, {pipeline_mode = #tpu.pipeline_mode<synchronous>, transform_indices = @transform_1, window_bounds = array<i64: 8, 128>}, {pipeline_mode = #tpu.pipeline_mode<synchronous>, transform_indices = @transform_2, window_bounds = array<i64: 384, 128>}, {pipeline_mode = #tpu.pipeline_mode<synchronous>, transform_indices = @transform_3, window_bounds = array<i64: 8, 128>}, {transform_indices = @transform_4, window_bounds = array<i64: 16, 128>}]} {
    %c0 = arith.constant 0 : index
    %c0_0 = arith.constant 0 : index
    %0 = vector.load %arg1[%c0, %c0_0] : memref<16x8xbf16, #tpu.memory_space<vmem>>, vector<16x8xbf16>
    %c0_1 = arith.constant 0 : index
    %c0_2 = arith.constant 0 : index
    %1 = vector.load %arg2[%c0_1, %c0_2] : memref<8x128xbf16, #tpu.memory_space<vmem>>, vector<8x128xbf16>
    %c0_3 = arith.constant 0 : index
    %c0_4 = arith.constant 0 : index
    %2 = vector.load %arg3[%c0_3, %c0_4] : memref<384x128xbf16, #tpu.memory_space<vmem>>, vector<128x128xbf16>
    %c128 = arith.constant 128 : index
    %c0_5 = arith.constant 0 : index
    %3 = vector.load %arg3[%c128, %c0_5] : memref<384x128xbf16, #tpu.memory_space<vmem>>, vector<128x128xbf16>
    %c256 = arith.constant 256 : index
    %c0_6 = arith.constant 0 : index
    %4 = vector.load %arg3[%c256, %c0_6] : memref<384x128xbf16, #tpu.memory_space<vmem>>, vector<128x128xbf16>
    %c0_7 = arith.constant 0 : index
    %c0_8 = arith.constant 0 : index
    %5 = vector.load %arg4[%c0_7, %c0_8] : memref<8x128xf32, #tpu.memory_space<vmem>>, vector<1x128xf32>
    %c1 = arith.constant 1 : index
    %c0_9 = arith.constant 0 : index
    %6 = vector.load %arg4[%c1, %c0_9] : memref<8x128xf32, #tpu.memory_space<vmem>>, vector<1x128xf32>
    %c2 = arith.constant 2 : index
    %c0_10 = arith.constant 0 : index
    %7 = vector.load %arg4[%c2, %c0_10] : memref<8x128xf32, #tpu.memory_space<vmem>>, vector<1x128xf32>
    %c3 = arith.constant 3 : index
    %c0_11 = arith.constant 0 : index
    %8 = vector.load %arg4[%c3, %c0_11] : memref<8x128xf32, #tpu.memory_space<vmem>>, vector<1x128xf32>
    %cst = arith.constant dense<0.000000e+00> : vector<16x128xf32>
    %9 = tpu.matmul %0, %1, %cst {dimension_numbers = #tpu.dot_dimension_numbers<[1], [0], [0], [1], [0, 0, 1, 1], [], []>} : vector<16x8xbf16>, vector<8x128xbf16>, vector<16x128xf32> -> vector<16x128xf32>
    %10 = vector.broadcast %5 : vector<1x128xf32> to vector<16x128xf32>
    %11 = arith.addf %9, %10 : vector<16x128xf32>
    %cst_12 = arith.constant 0.000000e+00 : f32
    %12 = vector.broadcast %cst_12 : f32 to vector<16x128xf32>
    %13 = arith.maximumf %11, %12 : vector<16x128xf32>
    %14 = arith.truncf %13 : vector<16x128xf32> to vector<16x128xbf16>
    %cst_13 = arith.constant dense<0.000000e+00> : vector<16x128xf32>
    %15 = tpu.matmul %14, %2, %cst_13 {dimension_numbers = #tpu.dot_dimension_numbers<[1], [0], [0], [1], [0, 0, 1, 1], [], []>} : vector<16x128xbf16>, vector<128x128xbf16>, vector<16x128xf32> -> vector<16x128xf32>
    %16 = vector.broadcast %6 : vector<1x128xf32> to vector<16x128xf32>
    %17 = arith.addf %15, %16 : vector<16x128xf32>
    %cst_14 = arith.constant 0.000000e+00 : f32
    %18 = vector.broadcast %cst_14 : f32 to vector<16x128xf32>
    %19 = arith.maximumf %17, %18 : vector<16x128xf32>
    %20 = arith.truncf %19 : vector<16x128xf32> to vector<16x128xbf16>
    %cst_15 = arith.constant dense<0.000000e+00> : vector<16x128xf32>
    %21 = tpu.matmul %20, %3, %cst_15 {dimension_numbers = #tpu.dot_dimension_numbers<[1], [0], [0], [1], [0, 0, 1, 1], [], []>} : vector<16x128xbf16>, vector<128x128xbf16>, vector<16x128xf32> -> vector<16x128xf32>
    %22 = vector.broadcast %7 : vector<1x128xf32> to vector<16x128xf32>
    %23 = arith.addf %21, %22 : vector<16x128xf32>
    %cst_16 = arith.constant 0.000000e+00 : f32
    %24 = vector.broadcast %cst_16 : f32 to vector<16x128xf32>
    %25 = arith.maximumf %23, %24 : vector<16x128xf32>
    %26 = arith.truncf %25 : vector<16x128xf32> to vector<16x128xbf16>
    %cst_17 = arith.constant dense<0.000000e+00> : vector<16x128xf32>
    %27 = tpu.matmul %26, %4, %cst_17 {dimension_numbers = #tpu.dot_dimension_numbers<[1], [0], [0], [1], [0, 0, 1, 1], [], []>} : vector<16x128xbf16>, vector<128x128xbf16>, vector<16x128xf32> -> vector<16x128xf32>
    %28 = vector.broadcast %8 : vector<1x128xf32> to vector<16x128xf32>
    %29 = arith.addf %27, %28 : vector<16x128xf32>
    %c0_18 = arith.constant 0 : index
    %c0_19 = arith.constant 0 : index
    %30 = vector.load %arg5[%c0_18, %c0_19] : memref<16x128xf32, #tpu.memory_space<vmem>>, vector<16x128xf32>
    tpu.vector_store %arg5[%c0_18, %c0_19], %29 {strides = array<i32>} : memref<16x128xf32, #tpu.memory_space<vmem>>, vector<16x128xf32>,
    return
  }
  func.func @transform_0(%arg0: i32) -> (i32, i32) {
    %c0_i32 = arith.constant 0 : i32
    %c0_i32_0 = arith.constant 0 : i32
    return %arg0, %c0_i32 : i32, i32
  }
  func.func @transform_1(%arg0: i32) -> (i32, i32) {
    %c0_i32 = arith.constant 0 : i32
    %c0_i32_0 = arith.constant 0 : i32
    %c0_i32_1 = arith.constant 0 : i32
    return %c0_i32, %c0_i32_0 : i32, i32
  }
  func.func @transform_2(%arg0: i32) -> (i32, i32) {
    %c0_i32 = arith.constant 0 : i32
    %c0_i32_0 = arith.constant 0 : i32
    %c0_i32_1 = arith.constant 0 : i32
    return %c0_i32, %c0_i32_0 : i32, i32
  }
  func.func @transform_3(%arg0: i32) -> (i32, i32) {
    %c0_i32 = arith.constant 0 : i32
    %c0_i32_0 = arith.constant 0 : i32
    %c0_i32_1 = arith.constant 0 : i32
    return %c0_i32, %c0_i32_0 : i32, i32
  }
  func.func @transform_4(%arg0: i32) -> (i32, i32) {
    %c0_i32 = arith.constant 0 : i32
    %c0_i32_0 = arith.constant 0 : i32
    return %arg0, %c0_i32 : i32, i32
  }
}

</mosaic_0001>

<llo_original>
// kernel: tpu_custom_call.1
$region0: #{tpu_custom_call.1}
  #allocation0 [shape = 'u32[]', space=smem, size = 0x4, offset = 0x4, fixed_abs, tag = 'smem constant byte address 0x4 - core index']
  #allocation1 [shape = 'u32[144,128]{1,0:T(1,128)}', space=vmem, size = 0x12000, scoped, tag = 'internal scratch']
  %s0 = inlined_call_operand.vmem [shape: bf16[16,8], index: 0, kind: input, shape index: {}]
  %s1 = inlined_call_operand.vmem [shape: bf16[8,128], index: 1, kind: input, shape index: {}]
  %s2 = inlined_call_operand.hbm [shape: bf16[384,128], index: 2, kind: input, shape index: {}]
  %s3 = inlined_call_operand.vmem [shape: f32[8,128], index: 3, kind: input, shape index: {}]
  %s4 = inlined_call_operand.hbm [shape: f32[16,128], index: 4, kind: output, shape index: {}]
  %s5 = sld [smem:[#allocation0]]
  $region30: #{tpu_custom_call.1} parent=0
    _
  %s7 = ssub.s32 1, %s5
  %s8 = scalar_select 0, %s7, %s5
  $region1: #{tpu_custom_call.1} parent=0
    #allocation2 [shape = 'u8[98304]{0}', space=vmem, size = 0x18000, scoped, tag = 'input window, operand 2, single buffered']
    #allocation3 [shape = 's32[1]{0}', space=sflag, size = 0x4, scoped, tag = 'scoped memory for tpu_custom_call.1']
    #allocation4 [shape = 's32[1]{0}', space=sflag, size = 0x4, scoped, tag = 'scoped memory for tpu_custom_call.1']
    #allocation5 [shape = 'u8[8192]{0}', space=vmem, size = 0x2000, scoped, tag = 'output window, operand 0, single buffered']
    %9 = vsyncpa [#allocation3], 0
    %10 = vsyncpa [#allocation4], 0
    // Predicated region
    $region2: #{tpu_custom_call.1} parent=1 // pred_check
      _
    $region3: #{tpu_custom_call.1} parent=1 // pred_check_branch
      %12 = sbr.rel (0) target = $region5
    $region4: #{tpu_custom_call.1} parent=1 // pred_region
      _
    $region5: #{tpu_custom_call.1} parent=1 // pred_fallthru
      _
    // Predicated region
    $region6: #{tpu_custom_call.1} parent=1 // pred_check
      _
    $region7: #{tpu_custom_call.1} parent=1 // pred_check_branch
      %14 = sbr.rel (0) target = $region9
    $region8: #{tpu_custom_call.1} parent=1 // pred_region
      _
    $region9: #{tpu_custom_call.1} parent=1 // pred_fallthru
      _
    // Predicated region
    $region10: #{tpu_custom_call.1} parent=1 // pred_check
      _
    $region11: #{tpu_custom_call.1} parent=1 // pred_check_branch
      %16 = sbr.rel (0) target = $region13
    $region12: #{tpu_custom_call.1} parent=1 // pred_region
      %s18 = ssub.s32 3072, 3072
      %19 = vsyncadd [#allocation3], %s18
      %s20 = sshll.u32 [#allocation2], 4
      %s21 = int_to_ptr.vmem [resolvable:$true] %s20
      %26 = dma.hbm_to_vmem [thread:$0]  %s2, 3072, %s21, [#allocation3], 64, 64, 4
    $region13: #{tpu_custom_call.1} parent=1 // pred_fallthru
      _
    // Predicated region
    $region14: #{tpu_custom_call.1} parent=1 // pred_check
      _
    $region15: #{tpu_custom_call.1} parent=1 // pred_check_branch
      %28 = sbr.rel (0) target = $region17
    $region16: #{tpu_custom_call.1} parent=1 // pred_region
      _
    $region17: #{tpu_custom_call.1} parent=1 // pred_fallthru
      _
    // Predicated region
    $region18: #{tpu_custom_call.1} parent=1 // pred_check
      _
    $region19: #{tpu_custom_call.1} parent=1 // pred_check_branch
      %30 = sbr.rel (0) target = $region21
    $region20: #{tpu_custom_call.1} parent=1 // pred_region
      %31 = dma.done [#allocation3], 3072
    $region21: #{tpu_custom_call.1} parent=1 // pred_fallthru
      _
    %v33 = vld [vmem:[%s0] sm:$0xf]
    %v34 = vld [vmem:[%s0 + $0x4] sm:$0xf]
    %v35 = vld [vmem:[%s1] sm:$0xf]
    %v36 = vld [vmem:[#allocation2] sm:$0xf]
    %v37 = vld [vmem:[#allocation2 + $0x4] sm:$0xf]
    %v38 = vld [vmem:[#allocation2 + $0x8] sm:$0xf]
    %v39 = vld [vmem:[#allocation2 + $0xc] sm:$0xf]
    %v40 = vld [vmem:[#allocation2 + $0x10] sm:$0xf]
    %v41 = vld [vmem:[#allocation2 + $0x14] sm:$0xf]
    %v42 = vld [vmem:[#allocation2 + $0x18] sm:$0xf]
    %v43 = vld [vmem:[#allocation2 + $0x1c] sm:$0xf]
    %v44 = vld [vmem:[#allocation2 + $0x20] sm:$0xf]
    %v45 = vld [vmem:[#allocation2 + $0x24] sm:$0xf]
    %v46 = vld [vmem:[#allocation2 + $0x28] sm:$0xf]
    %v47 = vld [vmem:[#allocation2 + $0x2c] sm:$0xf]
    %v48 = vld [vmem:[#allocation2 + $0x30] sm:$0xf]
    %v49 = vld [vmem:[#allocation2 + $0x34] sm:$0xf]
    %v50 = vld [vmem:[#allocation2 + $0x38] sm:$0xf]
    %v51 = vld [vmem:[#allocation2 + $0x3c] sm:$0xf]
    %v52 = vld [vmem:[#allocation2 + $0x40] sm:$0xf]
    %v53 = vld [vmem:[#allocation2 + $0x44] sm:$0xf]
    %v54 = vld [vmem:[#allocation2 + $0x48] sm:$0xf]
    %v55 = vld [vmem:[#allocation2 + $0x4c] sm:$0xf]
    %v56 = vld [vmem:[#allocation2 + $0x50] sm:$0xf]
    %v57 = vld [vmem:[#allocation2 + $0x54] sm:$0xf]
    %v58 = vld [vmem:[#allocation2 + $0x58] sm:$0xf]
    %v59 = vld [vmem:[#allocation2 + $0x5c] sm:$0xf]
    %v60 = vld [vmem:[#allocation2 + $0x60] sm:$0xf]
    %v61 = vld [vmem:[#allocation2 + $0x64] sm:$0xf]
    %v62 = vld [vmem:[#allocation2 + $0x68] sm:$0xf]
    %v63 = vld [vmem:[#allocation2 + $0x6c] sm:$0xf]
    %v64 = vld [vmem:[#allocation2 + $0x70] sm:$0xf]
    %v65 = vld [vmem:[#allocation2 + $0x74] sm:$0xf]
    %v66 = vld [vmem:[#allocation2 + $0x78] sm:$0xf]
    %v67 = vld [vmem:[#allocation2 + $0x7c] sm:$0xf]
    %v68 = vld [vmem:[#allocation2 + $0x80] sm:$0xf]
    %v69 = vld [vmem:[#allocation2 + $0x84] sm:$0xf]
    %v70 = vld [vmem:[#allocation2 + $0x88] sm:$0xf]
    %v71 = vld [vmem:[#allocation2 + $0x8c] sm:$0xf]
    %v72 = vld [vmem:[#allocation2 + $0x90] sm:$0xf]
    %v73 = vld [vmem:[#allocation2 + $0x94] sm:$0xf]
    %v74 = vld [vmem:[#allocation2 + $0x98] sm:$0xf]
    %v75 = vld [vmem:[#allocation2 + $0x9c] sm:$0xf]
    %v76 = vld [vmem:[#allocation2 + $0xa0] sm:$0xf]
    %v77 = vld [vmem:[#allocation2 + $0xa4] sm:$0xf]
    %v78 = vld [vmem:[#allocation2 + $0xa8] sm:$0xf]
    %v79 = vld [vmem:[#allocation2 + $0xac] sm:$0xf]
    %v80 = vld [vmem:[#allocation2 + $0xb0] sm:$0xf]
    %v81 = vld [vmem:[#allocation2 + $0xb4] sm:$0xf]
    %v82 = vld [vmem:[#allocation2 + $0xb8] sm:$0xf]
    %v83 = vld [vmem:[#allocation2 + $0xbc] sm:$0xf]
    %v84 = vld [vmem:[%s3] sm:$0x1]
    %v85 = vld [vmem:[%s3 + $0x1] sm:$0x1]
    %v86 = vld [vmem:[%s3 + $0x2] sm:$0x1]
    %v87 = vld [vmem:[%s3 + $0x3] sm:$0x1]
    %v88 = vlaneseq
    %v89 = vshrl.u32 %v88, 7
    %v90 = vsub.s32 0, %v89
    %v91 = vrot.slane %v84, %v90
    %v94 = vunpack.c.l.b16 %v33
    %v95 = vunpack.c.l.b16 %v34
    %v96 = vpack.c.b16 %v95, %v94
    %vm97 = vcmask 64512
    %v99 = vsel %vm97, %v96, 0
    %vm101 = vcmask 1043456
    %v103 = vsel %vm101, %v35, 0
    %105 = vmatprep.subr.bf16.mxu0 0
    %106 = vmatpush1.bf16.msra.mxu0 %v103
    %107 = vmatprep.subr.bf16.mxu0 0
    %108 = vmatpush1.bf16.msra.mxu0 0
    %109 = vmatprep.subr.bf16.mxu0 0
    %110 = vmatpush1.bf16.msra.mxu0 0
    %111 = vmatprep.subr.bf16.mxu0 0
    %112 = vmatpush1.bf16.msra.mxu0 0
    %113 = vmatprep.subr.bf16.mxu0 0
    %114 = vmatpush1.bf16.msra.mxu0 0
    %115 = vmatprep.subr.bf16.mxu0 0
    %116 = vmatpush1.bf16.msra.mxu0 0
    %117 = vmatprep.subr.bf16.mxu0 0
    %118 = vmatpush1.bf16.msra.mxu0 0
    %119 = vmatprep.subr.bf16.mxu0 0
    %120 = vmatpush1.bf16.msra.mxu0 0
    %121 = vmatprep.subr.bf16.mxu0 0
    %122 = vmatpush1.bf16.msra.mxu0 0
    %123 = vmatprep.subr.bf16.mxu0 0
    %124 = vmatpush1.bf16.msra.mxu0 0
    %125 = vmatprep.subr.bf16.mxu0 0
    %126 = vmatpush1.bf16.msra.mxu0 0
    %127 = vmatprep.subr.bf16.mxu0 0
    %128 = vmatpush1.bf16.msra.mxu0 0
    %129 = vmatprep.subr.bf16.mxu0 0
    %130 = vmatpush1.bf16.msra.mxu0 0
    %131 = vmatprep.subr.bf16.mxu0 0
    %132 = vmatpush1.bf16.msra.mxu0 0
    %133 = vmatprep.subr.bf16.mxu0 0
    %134 = vmatpush1.bf16.msra.mxu0 0
    %135 = vmatprep.subr.bf16.mxu0 0
    %136 = vmatpush1.bf16.msra.mxu0 0
    %137 = vmatprep.mubr.bf16.mxu0 0
    %138 = vmatmul.mubr.bf16.gmra.mrb[0].mxu0 %v99
    %v139 = vpop.f32.mrb[0].mxu0
    %v140 = vadd.f32 %v91, %v139
    %v141 = vpop.f32.mrb[0].mxu0
    %v142 = vpop.f32.mrb[0].mxu0
    %v143 = vadd.f32 %v91, %v142
    %v144 = vpop.f32.mrb[0].mxu0
    %145 = vdwg.mxu0
    %v146 = vmax.f32 %v140, 0.0
    %v147 = vmax.f32 %v143, 0.0
    %v148 = vpack.c.bf16 %v147, %v146
    %v149 = vlaneseq
    %v150 = vshrl.u32 %v149, 7
    %v151 = vsub.s32 0, %v150
    %v152 = vrot.slane %v85, %v151
    %v169 = vunpack.c.l.b16 %v36
    %v170 = vunpack.c.l.b16 %v37
    %v171 = vunpack.c.l.b16 %v38
    %v172 = vunpack.c.l.b16 %v39
    %v173 = vunpack.c.l.b16 %v40
    %v174 = vunpack.c.l.b16 %v41
    %v175 = vunpack.c.l.b16 %v42
    %v176 = vunpack.c.l.b16 %v43
    %v177 = vunpack.c.l.b16 %v44
    %v178 = vunpack.c.l.b16 %v45
    %v179 = vunpack.c.l.b16 %v46
    %v180 = vunpack.c.l.b16 %v47
    %v181 = vunpack.c.l.b16 %v48
    %v182 = vunpack.c.l.b16 %v49
    %v183 = vunpack.c.l.b16 %v50
    %v184 = vunpack.c.l.b16 %v51
    %v185 = vpack.c.b16 %v170, %v169
    %v186 = vpack.c.b16 %v172, %v171
    %v187 = vpack.c.b16 %v174, %v173
    %v188 = vpack.c.b16 %v176, %v175
    %v189 = vpack.c.b16 %v178, %v177
    %v190 = vpack.c.b16 %v180, %v179
    %v191 = vpack.c.b16 %v182, %v181
    %v192 = vpack.c.b16 %v184, %v183
    %201 = vmatprep.subr.bf16.mxu0 0
    %202 = vmatpush1.bf16.msra.mxu0 %v185
    %203 = vmatprep.subr.bf16.mxu0 0
    %204 = vmatpush1.bf16.msra.mxu0 %v186
    %205 = vmatprep.subr.bf16.mxu0 0
    %206 = vmatpush1.bf16.msra.mxu0 %v187
    %207 = vmatprep.subr.bf16.mxu0 0
    %208 = vmatpush1.bf16.msra.mxu0 %v188
    %209 = vmatprep.subr.bf16.mxu0 0
    %210 = vmatpush1.bf16.msra.mxu0 %v189
    %211 = vmatprep.subr.bf16.mxu0 0
    %212 = vmatpush1.bf16.msra.mxu0 %v190
    %213 = vmatprep.subr.bf16.mxu0 0
    %214 = vmatpush1.bf16.msra.mxu0 %v191
    %215 = vmatprep.subr.bf16.mxu0 0
    %216 = vmatpush1.bf16.msra.mxu0 %v192
    %217 = vmatprep.subr.bf16.mxu0 0
    %218 = vmatpush1.bf16.msra.mxu0 0
    %219 = vmatprep.subr.bf16.mxu0 0
    %220 = vmatpush1.bf16.msra.mxu0 0
    %221 = vmatprep.subr.bf16.mxu0 0
    %222 = vmatpush1.bf16.msra.mxu0 0
    %223 = vmatprep.subr.bf16.mxu0 0
    %224 = vmatpush1.bf16.msra.mxu0 0
    %225 = vmatprep.subr.bf16.mxu0 0
    %226 = vmatpush1.bf16.msra.mxu0 0
    %227 = vmatprep.subr.bf16.mxu0 0
    %228 = vmatpush1.bf16.msra.mxu0 0
    %229 = vmatprep.subr.bf16.mxu0 0
    %230 = vmatpush1.bf16.msra.mxu0 0
    %231 = vmatprep.subr.bf16.mxu0 0
    %232 = vmatpush1.bf16.msra.mxu0 0
    %233 = vmatprep.mubr.bf16.mxu0 0
    %234 = vmatmul.mubr.bf16.gmra.mrb[0].mxu0 %v148
    %v235 = vpop.f32.mrb[0].mxu0
    %v236 = vadd.f32 %v152, %v235
    %v237 = vpop.f32.mrb[0].mxu0
    %v238 = vpop.f32.mrb[0].mxu0
    %v239 = vadd.f32 %v152, %v238
    %v240 = vpop.f32.mrb[0].mxu0
    %241 = vdwg.mxu0
    %v242 = vmax.f32 %v236, 0.0
    %v243 = vmax.f32 %v239, 0.0
    %v244 = vpack.c.bf16 %v243, %v242
    %v245 = vlaneseq
    %v246 = vshrl.u32 %v245, 7
    %v247 = vsub.s32 0, %v246
    %v248 = vrot.slane %v86, %v247
    %v265 = vunpack.c.l.b16 %v52
    %v266 = vunpack.c.l.b16 %v53
    %v267 = vunpack.c.l.b16 %v54
    %v268 = vunpack.c.l.b16 %v55
    %v269 = vunpack.c.l.b16 %v56
    %v270 = vunpack.c.l.b16 %v57
    %v271 = vunpack.c.l.b16 %v58
    %v272 = vunpack.c.l.b16 %v59
    %v273 = vunpack.c.l.b16 %v60
    %v274 = vunpack.c.l.b16 %v61
    %v275 = vunpack.c.l.b16 %v62
    %v276 = vunpack.c.l.b16 %v63
    %v277 = vunpack.c.l.b16 %v64
    %v278 = vunpack.c.l.b16 %v65
    %v279 = vunpack.c.l.b16 %v66
    %v280 = vunpack.c.l.b16 %v67
    %v281 = vpack.c.b16 %v266, %v265
    %v282 = vpack.c.b16 %v268, %v267
    %v283 = vpack.c.b16 %v270, %v269
    %v284 = vpack.c.b16 %v272, %v271
    %v285 = vpack.c.b16 %v274, %v273
    %v286 = vpack.c.b16 %v276, %v275
    %v287 = vpack.c.b16 %v278, %v277
    %v288 = vpack.c.b16 %v280, %v279
    %297 = vmatprep.subr.bf16.mxu0 0
    %298 = vmatpush1.bf16.msra.mxu0 %v281
    %299 = vmatprep.subr.bf16.mxu0 0
    %300 = vmatpush1.bf16.msra.mxu0 %v282
    %301 = vmatprep.subr.bf16.mxu0 0
    %302 = vmatpush1.bf16.msra.mxu0 %v283
    %303 = vmatprep.subr.bf16.mxu0 0
    %304 = vmatpush1.bf16.msra.mxu0 %v284
    %305 = vmatprep.subr.bf16.mxu0 0
    %306 = vmatpush1.bf16.msra.mxu0 %v285
    %307 = vmatprep.subr.bf16.mxu0 0
    %308 = vmatpush1.bf16.msra.mxu0 %v286
    %309 = vmatprep.subr.bf16.mxu0 0
    %310 = vmatpush1.bf16.msra.mxu0 %v287
    %311 = vmatprep.subr.bf16.mxu0 0
    %312 = vmatpush1.bf16.msra.mxu0 %v288
    %313 = vmatprep.subr.bf16.mxu0 0
    %314 = vmatpush1.bf16.msra.mxu0 0
    %315 = vmatprep.subr.bf16.mxu0 0
    %316 = vmatpush1.bf16.msra.mxu0 0
    %317 = vmatprep.subr.bf16.mxu0 0
    %318 = vmatpush1.bf16.msra.mxu0 0
    %319 = vmatprep.subr.bf16.mxu0 0
    %320 = vmatpush1.bf16.msra.mxu0 0
    %321 = vmatprep.subr.bf16.mxu0 0
    %322 = vmatpush1.bf16.msra.mxu0 0
    %323 = vmatprep.subr.bf16.mxu0 0
    %324 = vmatpush1.bf16.msra.mxu0 0
    %325 = vmatprep.subr.bf16.mxu0 0
    %326 = vmatpush1.bf16.msra.mxu0 0
    %327 = vmatprep.subr.bf16.mxu0 0
    %328 = vmatpush1.bf16.msra.mxu0 0
    %329 = vmatprep.mubr.bf16.mxu0 0
    %330 = vmatmul.mubr.bf16.gmra.mrb[0].mxu0 %v244
    %v331 = vpop.f32.mrb[0].mxu0
    %v332 = vadd.f32 %v248, %v331
    %v333 = vpop.f32.mrb[0].mxu0
    %v334 = vpop.f32.mrb[0].mxu0
    %v335 = vadd.f32 %v248, %v334
    %v336 = vpop.f32.mrb[0].mxu0
    %337 = vdwg.mxu0
    %v338 = vmax.f32 %v332, 0.0
    %v339 = vmax.f32 %v335, 0.0
    %v340 = vpack.c.bf16 %v339, %v338
    %v341 = vlaneseq
    %v342 = vshrl.u32 %v341, 7
    %v343 = vsub.s32 0, %v342
    %v344 = vrot.slane %v87, %v343
    %v361 = vunpack.c.l.b16 %v68
    %v362 = vunpack.c.l.b16 %v69
    %v363 = vunpack.c.l.b16 %v70
    %v364 = vunpack.c.l.b16 %v71
    %v365 = vunpack.c.l.b16 %v72
    %v366 = vunpack.c.l.b16 %v73
    %v367 = vunpack.c.l.b16 %v74
    %v368 = vunpack.c.l.b16 %v75
    %v369 = vunpack.c.l.b16 %v76
    %v370 = vunpack.c.l.b16 %v77
    %v371 = vunpack.c.l.b16 %v78
    %v372 = vunpack.c.l.b16 %v79
    %v373 = vunpack.c.l.b16 %v80
    %v374 = vunpack.c.l.b16 %v81
    %v375 = vunpack.c.l.b16 %v82
    %v376 = vunpack.c.l.b16 %v83
    %v377 = vpack.c.b16 %v362, %v361
    %v378 = vpack.c.b16 %v364, %v363
    %v379 = vpack.c.b16 %v366, %v365
    %v380 = vpack.c.b16 %v368, %v367
    %v381 = vpack.c.b16 %v370, %v369
    %v382 = vpack.c.b16 %v372, %v371
    %v383 = vpack.c.b16 %v374, %v373
    %v384 = vpack.c.b16 %v376, %v375
    %393 = vmatprep.subr.bf16.mxu0 0
    %394 = vmatpush1.bf16.msra.mxu0 %v377
    %395 = vmatprep.subr.bf16.mxu0 0
    %396 = vmatpush1.bf16.msra.mxu0 %v378
    %397 = vmatprep.subr.bf16.mxu0 0
    %398 = vmatpush1.bf16.msra.mxu0 %v379
    %399 = vmatprep.subr.bf16.mxu0 0
    %400 = vmatpush1.bf16.msra.mxu0 %v380
    %401 = vmatprep.subr.bf16.mxu0 0
    %402 = vmatpush1.bf16.msra.mxu0 %v381
    %403 = vmatprep.subr.bf16.mxu0 0
    %404 = vmatpush1.bf16.msra.mxu0 %v382
    %405 = vmatprep.subr.bf16.mxu0 0
    %406 = vmatpush1.bf16.msra.mxu0 %v383
    %407 = vmatprep.subr.bf16.mxu0 0
    %408 = vmatpush1.bf16.msra.mxu0 %v384
    %409 = vmatprep.subr.bf16.mxu0 0
    %410 = vmatpush1.bf16.msra.mxu0 0
    %411 = vmatprep.subr.bf16.mxu0 0
    %412 = vmatpush1.bf16.msra.mxu0 0
    %413 = vmatprep.subr.bf16.mxu0 0
    %414 = vmatpush1.bf16.msra.mxu0 0
    %415 = vmatprep.subr.bf16.mxu0 0
    %416 = vmatpush1.bf16.msra.mxu0 0
    %417 = vmatprep.subr.bf16.mxu0 0
    %418 = vmatpush1.bf16.msra.mxu0 0
    %419 = vmatprep.subr.bf16.mxu0 0
    %420 = vmatpush1.bf16.msra.mxu0 0
    %421 = vmatprep.subr.bf16.mxu0 0
    %422 = vmatpush1.bf16.msra.mxu0 0
    %423 = vmatprep.subr.bf16.mxu0 0
    %424 = vmatpush1.bf16.msra.mxu0 0
    %425 = vmatprep.mubr.bf16.mxu0 0
    %426 = vmatmul.mubr.bf16.gmra.mrb[0].mxu0 %v340
    %v427 = vpop.f32.mrb[0].mxu0
    %v428 = vadd.f32 %v344, %v427
    %v429 = vpop.f32.mrb[0].mxu0
    %v430 = vpop.f32.mrb[0].mxu0
    %v431 = vadd.f32 %v344, %v430
    %v432 = vpop.f32.mrb[0].mxu0
    %433 = vdwg.mxu0
    %434 = vst [vmem:[#allocation5] sm:$0xff] %v428
    %435 = vst [vmem:[#allocation5 + $0x8] sm:$0xff] %v431
    // Predicated region
    $region22: #{tpu_custom_call.1} parent=1 // pred_check
      _
    $region23: #{tpu_custom_call.1} parent=1 // pred_check_branch
      %437 = sbr.rel (0) target = $region25
    $region24: #{tpu_custom_call.1} parent=1 // pred_region
      %s439 = ssub.s32 256, 256
      %440 = vsyncadd [#allocation4], %s439
      %s441 = sshll.u32 [#allocation5], 4
      %s442 = int_to_ptr.vmem [resolvable:$true] %s441
      %447 = dma.vmem_to_hbm [thread:$0]  %s442, 256, %s4, [#allocation4], 128, 128, 8
    $region25: #{tpu_custom_call.1} parent=1 // pred_fallthru
      _
    // Predicated region
    $region26: #{tpu_custom_call.1} parent=1 // pred_check
      _
    $region27: #{tpu_custom_call.1} parent=1 // pred_check_branch
      %449 = sbr.rel (0) target = $region29
    $region28: #{tpu_custom_call.1} parent=1 // pred_region
      %450 = dma.done [#allocation4], 256
    $region29: #{tpu_custom_call.1} parent=1 // pred_fallthru
      _
    %451 = vsyncpa [#allocation3], 1
    %452 = vsyncpa [#allocation4], 1

</llo_original>
